<compile_context>
chip_gen: v7x
topology: tpu7x:2x2x1
jax: 0.10.0
libtpu: 0.0.40
codegen_flags: <defaults>
</compile_context>

<pallas_src>
import functools
import math

import jax
import jax.numpy as jnp
import numpy as np
from jax.experimental import pallas as pl
from jax.experimental.pallas import tpu as pltpu

EPS = 1e-6
LOG_STD_MAX = 2.0
LOG_STD_MIN = -20.0
# NOTE: if ACTION_SCALE != 1.0, the SAC change-of-variables term
# (-action_dim * log(ACTION_SCALE)) must be subtracted from logp_pi.  With the
# default Box(-1, 1) action space used here it is exactly 1.0.
ACTION_SCALE = 1.0

_HALF_LOG_2PI = 0.5 * math.log(2.0 * math.pi)  # folded at trace time

# Number of lanes in the packed output slab (lane-dense: multiple of 128).
_OUT_LANES = 128

_VMEM = pl.BlockSpec(memory_space=pltpu.MemorySpace.VMEM)


def _round_up(x, m):
    return (x + m - 1) // m * m


# ---------------------------------------------------------------------------
# Static layout of the packed parameter slab (all offsets are Python ints).
# Every block sits at lane offset 0 and at an 8-aligned sublane offset.
# ---------------------------------------------------------------------------
def make_layout(in_features, action_dim, h1, h2):
    A = action_dim
    L = {"in": in_features, "A": A, "h1": h1, "h2": h2}
    cur = 0

    def take(name, rows):
        nonlocal cur
        L[name] = cur
        cur = _round_up(cur + rows, 8)

    take("pw0", in_features)   # policy layer 0 weight      (IN, h1)
    take("pw1", h1)            # policy layer 1 weight      (h1, h2)
    take("phd", h2)            # fused [mu | log_std] heads (h2, 2A)
    take("w0x", in_features)   # fused Q state cols         (IN, 4h1)
    take("w0a", 2 * A)         # fused Q action cols        (2A, 4h1)
    take("w1", 4 * h1)         # block-diag Q layer 1       (4h1, 4h2)
    take("w2", 4 * h2)         # block-diag Q layer 2       (4h2, 4)
    take("bias", 6)            # 6 bias rows
    L["rows"] = cur
    L["cols"] = _round_up(max(4 * h1, 4 * h2, 2 * A, h1, h2, 4), 128)
    return L


# ---------------------------------------------------------------------------
# Parameter packing — runs ONCE at parameter-creation/update time, not in the
# per-step hot path.
# ---------------------------------------------------------------------------
def pack_params(p, q1p, q2p, L):
    IN, A, H1, H2 = L["in"], L["A"], L["h1"], L["h2"]
    slab = np.zeros((L["rows"], L["cols"]), np.float32)

    def put(name, arr):
        arr = np.asarray(arr, np.float32)
        r = L[name]
        slab[r:r + arr.shape[0], 0:arr.shape[1]] = arr

    put("pw0", p["w0"])
    put("pw1", p["w1"])
    put("phd", np.concatenate([np.asarray(p["wmu"]), np.asarray(p["wls"])],
                              axis=1))

    # Fused Q first layer.  Lane groups (each h1 wide) are ordered
    # [q1(x,a), q2(x,a), q1(x,pi), q2(x,pi)].
    q1w0 = np.asarray(q1p["w0"], np.float32)
    q2w0 = np.asarray(q2p["w0"], np.float32)
    q1w0x, q1w0a = q1w0[:IN], q1w0[IN:]
    q2w0x, q2w0a = q2w0[:IN], q2w0[IN:]
    put("w0x", np.concatenate([q1w0x, q2w0x, q1w0x, q2w0x], axis=1))
    w0a4 = np.zeros((2 * A, 4 * H1), np.float32)
    w0a4[:A, 0:H1] = q1w0a            # a  -> q1(x,a)
    w0a4[:A, H1:2 * H1] = q2w0a       # a  -> q2(x,a)
    w0a4[A:, 2 * H1:3 * H1] = q1w0a   # pi -> q1(x,pi)
    w0a4[A:, 3 * H1:4 * H1] = q2w0a   # pi -> q2(x,pi)
    put("w0a", w0a4)

    # Block-diagonal fused layers 1 / 2 (diag order q1, q2, q1, q2).
    w1_4 = np.zeros((4 * H1, 4 * H2), np.float32)
    w2_4 = np.zeros((4 * H2, 4), np.float32)
    for i, (w1, w2) in enumerate(
            [(q1p["w1"], q1p["w2"]), (q2p["w1"], q2p["w2"])] * 2):
        w1_4[i * H1:(i + 1) * H1, i * H2:(i + 1) * H2] = np.asarray(w1)
        w2_4[i * H2:(i + 1) * H2, i:i + 1] = np.asarray(w2)
    put("w1", w1_4)
    put("w2", w2_4)

    # Bias band (6 rows).
    b = L["bias"]
    slab[b + 0, 0:H1] = np.asarray(p["b0"]).ravel()
    slab[b + 1, 0:H2] = np.asarray(p["b1"]).ravel()
    slab[b + 2, 0:2 * A] = np.concatenate(
        [np.asarray(p["bmu"]).ravel(), np.asarray(p["bls"]).ravel()])
    slab[b + 3, 0:4 * H1] = np.concatenate(
        [np.asarray(q1p["b0"]).ravel(), np.asarray(q2p["b0"]).ravel()] * 2)
    slab[b + 4, 0:4 * H2] = np.concatenate(
        [np.asarray(q1p["b1"]).ravel(), np.asarray(q2p["b1"]).ravel()] * 2)
    slab[b + 5, 0:4] = np.concatenate(
        [np.asarray(q1p["b2"]).ravel(), np.asarray(q2p["b2"]).ravel()] * 2)
    return jnp.asarray(slab)


# ---------------------------------------------------------------------------
# Fused Pallas kernel: policy + both Q nets on (x,a) and (x,pi)
# ---------------------------------------------------------------------------
def _actor_critic_kernel(in_ref, w_ref, out_ref, *, L):
    f32 = jnp.float32
    IN, A, H1, H2 = L["in"], L["A"], L["h1"], L["h2"]
    B = in_ref.shape[0]

    xae = in_ref[...]                                 # single (B, IN+2A) load
    x = xae[:, 0:IN]
    a = xae[:, IN:IN + A]
    eps = xae[:, IN + A:IN + 2 * A]

    bias = w_ref[L["bias"]:L["bias"] + 6, :]          # 6 bias rows, one load

    # ---------------- GaussianPolicy ----------------
    pw0 = w_ref[L["pw0"]:L["pw0"] + IN, 0:H1]
    pw1 = w_ref[L["pw1"]:L["pw1"] + H1, 0:H2]
    phd = w_ref[L["phd"]:L["phd"] + H2, 0:2 * A]      # [wmu | wls]

    h = jnp.maximum(jnp.dot(x, pw0, preferred_element_type=f32)
                    + bias[0:1, 0:H1], 0.0)
    h = jnp.maximum(jnp.dot(h, pw1, preferred_element_type=f32)
                    + bias[1:2, 0:H2], 0.0)
    heads = jnp.dot(h, phd, preferred_element_type=f32) + bias[2:3, 0:2 * A]
    mu = heads[:, 0:A]
    log_std = jnp.tanh(heads[:, A:2 * A])
    log_std = LOG_STD_MIN + 0.5 * (LOG_STD_MAX - LOG_STD_MIN) * (log_std + 1.0)
    std = jnp.exp(log_std)

    pi = mu + std * eps                               # reparameterized sample
    mu_t = jnp.tanh(mu)
    pi_t = jnp.tanh(pi)
    clipped = jnp.clip(1.0 - pi_t * pi_t, 0.0, 1.0)   # _clip_but_pass_gradient fwd
    # Normal log-prob + tanh-squash correction, one cross-lane reduction:
    logp_pi = (jnp.sum(-0.5 * eps * eps - log_std - jnp.log(clipped + EPS),
                       axis=1, keepdims=True)
               - (A * _HALF_LOG_2PI))

    pi_out = pi_t * ACTION_SCALE
    mu_out = mu_t * ACTION_SCALE

    # ---------------- lane-fused Q networks ----------------
    # Lane groups of every fused activation: [q1(x,a) | q2(x,a) | q1(x,pi) | q2(x,pi)]
    w0x = w_ref[L["w0x"]:L["w0x"] + IN, 0:4 * H1]
    w0a = w_ref[L["w0a"]:L["w0a"] + 2 * A, 0:4 * H1]
    w1 = w_ref[L["w1"]:L["w1"] + 4 * H1, 0:4 * H2]
    w2 = w_ref[L["w2"]:L["w2"] + 4 * H2, 0:4]

    act = jnp.concatenate([a, pi_out], axis=1)        # (B, 2A)
    h0 = jnp.maximum(jnp.dot(x, w0x, preferred_element_type=f32)
                     + jnp.dot(act, w0a, preferred_element_type=f32)
                     + bias[3:4, 0:4 * H1], 0.0)
    h1 = jnp.maximum(jnp.dot(h0, w1, preferred_element_type=f32)
                     + bias[4:5, 0:4 * H2], 0.0)
    q = jnp.dot(h1, w2, preferred_element_type=f32) + bias[5:6, 0:4]  # (B, 4)

    # ---------------- single lane-dense output store ----------------
    # lanes: [0:A) pi | [A:2A) mu | 2A logp | 2A+1 q1 | 2A+2 q2
    #        | 2A+3 q1_pi | 2A+4 q2_pi | zero pad
    pad = jnp.zeros((B, out_ref.shape[1] - (2 * A + 5)), f32)
    out_ref[...] = jnp.concatenate([pi_out, mu_out, logp_pi, q, pad], axis=1)


# ---------------------------------------------------------------------------
# Wrapper: one pallas_call, 2 input DMAs, whole problem VMEM-resident.
# ---------------------------------------------------------------------------
def make_forward(L):
    IN, A, H1, H2 = L["in"], L["A"], L["h1"], L["h2"]
    kernel = functools.partial(_actor_critic_kernel, L=L)

    def forward(x, a, eps, param_slab):
        B = x.shape[0]
        xae = jnp.concatenate([x, a, eps], axis=1)    # 3 tiny DMAs -> 1

        flops = 2 * B * (IN * H1 + H1 * H2 + H2 * 2 * A
                         + IN * 4 * H1 + 2 * A * 4 * H1
                         + 4 * H1 * 4 * H2 + 4 * H2 * 4)
        cost = pl.CostEstimate(
            flops=flops,
            transcendentals=5 * B * A,
            bytes_accessed=4 * (xae.size + param_slab.size + B * _OUT_LANES))

        slab = pl.pallas_call(
            kernel,
            out_shape=jax.ShapeDtypeStruct((B, _OUT_LANES), jnp.float32),
            in_specs=[_VMEM, _VMEM],
            out_specs=_VMEM,
            cost_estimate=cost,
        )(xae, param_slab)

        pi = slab[:, 0:A]
        mu = slab[:, A:2 * A]
        logp_pi = slab[:, 2 * A]
        q1 = slab[:, 2 * A + 1]
        q2 = slab[:, 2 * A + 2]
        q1_pi = slab[:, 2 * A + 3]
        q2_pi = slab[:, 2 * A + 4]
        return pi, mu, logp_pi, q1, q2, q1_pi, q2_pi

    return forward


# ---------------------------------------------------------------------------
# Pure-JAX reference (same math, used only for a sanity check)
# ---------------------------------------------------------------------------
def reference_forward(x, a, eps, p, q1p, q2p):
    h = jnp.maximum(x @ p["w0"] + p["b0"], 0.0)
    h = jnp.maximum(h @ p["w1"] + p["b1"], 0.0)
    mu = h @ p["wmu"] + p["bmu"]
    log_std = jnp.tanh(h @ p["wls"] + p["bls"])
    log_std = LOG_STD_MIN + 0.5 * (LOG_STD_MAX - LOG_STD_MIN) * (log_std + 1.0)
    std = jnp.exp(log_std)
    pi = mu + std * eps
    logp_pi = jnp.sum(-0.5 * eps * eps - log_std - _HALF_LOG_2PI, axis=1)
    mu_t = jnp.tanh(mu)
    pi_t = jnp.tanh(pi)
    logp_pi = logp_pi - jnp.sum(
        jnp.log(jnp.clip(1.0 - pi_t * pi_t, 0.0, 1.0) + EPS), axis=1)
    pi_s = pi_t * ACTION_SCALE
    mu_s = mu_t * ACTION_SCALE

    def q_fn(z, q):
        h = jnp.maximum(z @ q["w0"] + q["b0"], 0.0)
        h = jnp.maximum(h @ q["w1"] + q["b1"], 0.0)
        return (h @ q["w2"] + q["b2"])[:, 0]

    xa = jnp.concatenate([x, a], axis=1)
    xpi = jnp.concatenate([x, pi_s], axis=1)
    return (pi_s, mu_s, logp_pi,
            q_fn(xa, q1p), q_fn(xa, q2p), q_fn(xpi, q1p), q_fn(xpi, q2p))


# ---------------------------------------------------------------------------
# Deterministic parameter initialization (synthetic — shapes from __init__)
# ---------------------------------------------------------------------------
def _linear(key, n_in, n_out, scale=0.1, zero_bias=True):
    kw, kb = jax.random.split(key)
    w = scale * jax.random.normal(kw, (n_in, n_out), jnp.float32)
    if zero_bias:
        b = jnp.zeros((1, n_out), jnp.float32)
    else:
        b = 0.01 * jax.random.normal(kb, (1, n_out), jnp.float32)
    return w, b


def init_params(key, in_features, action_dim, hidden=(32, 32)):
    keys = jax.random.split(key, 10)
    h1, h2 = hidden

    # GaussianPolicy: trunk biases are zero (MLP zeros them); mu / log_std
    # heads keep default (non-zero) bias init.
    p = {}
    p["w0"], p["b0"] = _linear(keys[0], in_features, h1)
    p["w1"], p["b1"] = _linear(keys[1], h1, h2)
    p["wmu"], p["bmu"] = _linear(keys[2], h2, action_dim, zero_bias=False)
    p["wls"], p["bls"] = _linear(keys[3], h2, action_dim, zero_bias=False)

    def q_params(k0, k1, k2):
        q = {}
        q["w0"], q["b0"] = _linear(k0, in_features + action_dim, h1)
        q["w1"], q["b1"] = _linear(k1, h1, h2)
        q["w2"], q["b2"] = _linear(k2, h2, 1)
        return q

    q1 = q_params(keys[4], keys[5], keys[6])
    q2 = q_params(keys[7], keys[8], keys[9])
    return p, q1, q2


# ---------------------------------------------------------------------------
if __name__ == "__main__":
    B = 8
    IN_FEATURES = 32
    ACTION_DIM = 4
    HIDDEN = (32, 32)

    key = jax.random.PRNGKey(0)
    kx, ka, keps, kparams = jax.random.split(key, 4)

    x = jax.random.normal(kx, (B, IN_FEATURES), jnp.float32)
    a = jax.random.normal(ka, (B, ACTION_DIM), jnp.float32)
    eps = jax.random.normal(keps, (B, ACTION_DIM), jnp.float32)  # rsample noise

    policy_params, q1_params, q2_params = init_params(
        kparams, IN_FEATURES, ACTION_DIM, HIDDEN)

    # Pack parameters once (outside the per-step hot path).
    layout = make_layout(IN_FEATURES, ACTION_DIM, *HIDDEN)
    param_slab = pack_params(policy_params, q1_params, q2_params, layout)

    fwd = jax.jit(make_forward(layout))
    outs = jax.block_until_ready(fwd(x, a, eps, param_slab))

    pi, mu, logp_pi, q1, q2, q1_pi, q2_pi = outs
    assert pi.shape == (B, ACTION_DIM)
    assert mu.shape == (B, ACTION_DIM)
    assert logp_pi.shape == (B,)
    assert q1.shape == (B,) and q2.shape == (B,)
    assert q1_pi.shape == (B,) and q2_pi.shape == (B,)

    # sanity check against a pure-JAX reference (loose tolerance: MXU f32
    # matmul path may differ slightly from XLA's default matmul precision)
    refs = reference_forward(x, a, eps, policy_params, q1_params, q2_params)
    for got, want in zip(outs, refs):
        np.testing.assert_allclose(np.asarray(got), np.asarray(want),
                                   rtol=2e-2, atol=2e-2)

    print("KERNEL_OK")
</pallas_src>

<mosaic_0001>
module attributes {stable_mosaic.version = 11 : i64} {
  func.func @_actor_critic_kernel(%arg0: memref<8x40xf32, #tpu.memory_space<vmem>>, %arg1: memref<400x128xf32, #tpu.memory_space<vmem>>, %arg2: memref<8x128xf32, #tpu.memory_space<vmem>>) attributes {dimension_semantics = [], scalar_prefetch = 0 : i64, scratch_operands = 0 : i64, tpu.core_type = #tpu.core_type<tc>} {
    %c0 = arith.constant 0 : index
    %c0_0 = arith.constant 0 : index
    %0 = vector.load %arg0[%c0, %c0_0] : memref<8x40xf32, #tpu.memory_space<vmem>>, vector<8x40xf32>
    %1 = vector.extract_strided_slice %0 {offsets = [0, 0], sizes = [8, 32], strides = [1, 1]} : vector<8x40xf32> to vector<8x32xf32>
    %2 = vector.extract_strided_slice %0 {offsets = [0, 32], sizes = [8, 4], strides = [1, 1]} : vector<8x40xf32> to vector<8x4xf32>
    %3 = vector.extract_strided_slice %0 {offsets = [0, 36], sizes = [8, 4], strides = [1, 1]} : vector<8x40xf32> to vector<8x4xf32>
    %c392 = arith.constant 392 : index
    %c0_1 = arith.constant 0 : index
    %4 = vector.load %arg1[%c392, %c0_1] : memref<400x128xf32, #tpu.memory_space<vmem>>, vector<6x128xf32>
    %c0_2 = arith.constant 0 : index
    %c0_3 = arith.constant 0 : index
    %5 = vector.load %arg1[%c0_2, %c0_3] : memref<400x128xf32, #tpu.memory_space<vmem>>, vector<32x32xf32>
    %c32 = arith.constant 32 : index
    %c0_4 = arith.constant 0 : index
    %6 = vector.load %arg1[%c32, %c0_4] : memref<400x128xf32, #tpu.memory_space<vmem>>, vector<32x32xf32>
    %c64 = arith.constant 64 : index
    %c0_5 = arith.constant 0 : index
    %7 = vector.load %arg1[%c64, %c0_5] : memref<400x128xf32, #tpu.memory_space<vmem>>, vector<32x8xf32>
    %cst = arith.constant dense<0.000000e+00> : vector<8x32xf32>
    %8 = tpu.matmul %1, %5, %cst {dimension_numbers = #tpu.dot_dimension_numbers<[1], [0], [0], [1], [0, 0, 1, 1], [], []>} : vector<8x32xf32>, vector<32x32xf32>, vector<8x32xf32> -> vector<8x32xf32>
    %9 = vector.extract_strided_slice %4 {offsets = [0, 0], sizes = [1, 32], strides = [1, 1]} : vector<6x128xf32> to vector<1x32xf32>
    %10 = vector.broadcast %9 : vector<1x32xf32> to vector<8x32xf32>
    %11 = arith.addf %8, %10 : vector<8x32xf32>
    %cst_6 = arith.constant 0.000000e+00 : f32
    %12 = vector.broadcast %cst_6 : f32 to vector<8x32xf32>
    %13 = arith.maximumf %11, %12 : vector<8x32xf32>
    %cst_7 = arith.constant dense<0.000000e+00> : vector<8x32xf32>
    %14 = tpu.matmul %13, %6, %cst_7 {dimension_numbers = #tpu.dot_dimension_numbers<[1], [0], [0], [1], [0, 0, 1, 1], [], []>} : vector<8x32xf32>, vector<32x32xf32>, vector<8x32xf32> -> vector<8x32xf32>
    %15 = vector.extract_strided_slice %4 {offsets = [1, 0], sizes = [1, 32], strides = [1, 1]} : vector<6x128xf32> to vector<1x32xf32>
    %16 = vector.broadcast %15 : vector<1x32xf32> to vector<8x32xf32>
    %17 = arith.addf %14, %16 : vector<8x32xf32>
    %cst_8 = arith.constant 0.000000e+00 : f32
    %18 = vector.broadcast %cst_8 : f32 to vector<8x32xf32>
    %19 = arith.maximumf %17, %18 : vector<8x32xf32>
    %cst_9 = arith.constant dense<0.000000e+00> : vector<8x8xf32>
    %20 = tpu.matmul %19, %7, %cst_9 {dimension_numbers = #tpu.dot_dimension_numbers<[1], [0], [0], [1], [0, 0, 1, 1], [], []>} : vector<8x32xf32>, vector<32x8xf32>, vector<8x8xf32> -> vector<8x8xf32>
    %21 = vector.extract_strided_slice %4 {offsets = [2, 0], sizes = [1, 8], strides = [1, 1]} : vector<6x128xf32> to vector<1x8xf32>
    %22 = vector.broadcast %21 : vector<1x8xf32> to vector<8x8xf32>
    %23 = arith.addf %20, %22 : vector<8x8xf32>
    %24 = vector.extract_strided_slice %23 {offsets = [0, 0], sizes = [8, 4], strides = [1, 1]} : vector<8x8xf32> to vector<8x4xf32>
    %25 = vector.extract_strided_slice %23 {offsets = [0, 4], sizes = [8, 4], strides = [1, 1]} : vector<8x8xf32> to vector<8x4xf32>
    %26 = math.tanh %25 : vector<8x4xf32>
    %cst_10 = arith.constant 1.000000e+00 : f32
    %27 = vector.broadcast %cst_10 : f32 to vector<8x4xf32>
    %28 = arith.addf %26, %27 : vector<8x4xf32>
    %cst_11 = arith.constant 1.100000e+01 : f32
    %29 = vector.broadcast %cst_11 : f32 to vector<8x4xf32>
    %30 = arith.mulf %29, %28 : vector<8x4xf32>
    %cst_12 = arith.constant -2.000000e+01 : f32
    %31 = vector.broadcast %cst_12 : f32 to vector<8x4xf32>
    %32 = arith.addf %31, %30 : vector<8x4xf32>
    %33 = math.exp %32 : vector<8x4xf32>
    %34 = arith.mulf %33, %3 : vector<8x4xf32>
    %35 = arith.addf %24, %34 : vector<8x4xf32>
    %36 = math.tanh %24 : vector<8x4xf32>
    %37 = math.tanh %35 : vector<8x4xf32>
    %38 = arith.mulf %37, %37 : vector<8x4xf32>
    %cst_13 = arith.constant 1.000000e+00 : f32
    %39 = vector.broadcast %cst_13 : f32 to vector<8x4xf32>
    %40 = arith.subf %39, %38 : vector<8x4xf32>
    %cst_14 = arith.constant 0.000000e+00 : f32
    %cst_15 = arith.constant 1.000000e+00 : f32
    %41 = vector.broadcast %cst_14 : f32 to vector<8x4xf32>
    %42 = arith.maximumf %41, %40 : vector<8x4xf32>
    %43 = vector.broadcast %cst_15 : f32 to vector<8x4xf32>
    %44 = arith.minimumf %43, %42 : vector<8x4xf32>
    %cst_16 = arith.constant -5.000000e-01 : f32
    %45 = vector.broadcast %cst_16 : f32 to vector<8x4xf32>
    %46 = arith.mulf %45, %3 : vector<8x4xf32>
    %47 = arith.mulf %46, %3 : vector<8x4xf32>
    %48 = arith.subf %47, %32 : vector<8x4xf32>
    %cst_17 = arith.constant 9.99999997E-7 : f32
    %49 = vector.broadcast %cst_17 : f32 to vector<8x4xf32>
    %50 = arith.addf %44, %49 : vector<8x4xf32>
    %51 = math.log %50 : vector<8x4xf32>
    %52 = arith.subf %48, %51 : vector<8x4xf32>
    %cst_18 = arith.constant dense<0.000000e+00> : vector<8xf32>
    %53 = vector.multi_reduction <add>, %52, %cst_18 [1] : vector<8x4xf32> to vector<8xf32>
    %54 = vector.shape_cast %53 : vector<8xf32> to vector<8x1xf32>
    %cst_19 = arith.constant 3.67575407 : f32
    %55 = vector.broadcast %cst_19 : f32 to vector<8x1xf32>
    %56 = arith.subf %54, %55 : vector<8x1xf32>
    %cst_20 = arith.constant 1.000000e+00 : f32
    %57 = vector.broadcast %cst_20 : f32 to vector<8x4xf32>
    %58 = arith.mulf %37, %57 : vector<8x4xf32>
    %cst_21 = arith.constant 1.000000e+00 : f32
    %59 = vector.broadcast %cst_21 : f32 to vector<8x4xf32>
    %60 = arith.mulf %36, %59 : vector<8x4xf32>
    %c96 = arith.constant 96 : index
    %c0_22 = arith.constant 0 : index
    %61 = vector.load %arg1[%c96, %c0_22] : memref<400x128xf32, #tpu.memory_space<vmem>>, vector<32x128xf32>
    %c128 = arith.constant 128 : index
    %c0_23 = arith.constant 0 : index
    %62 = vector.load %arg1[%c128, %c0_23] : memref<400x128xf32, #tpu.memory_space<vmem>>, vector<8x128xf32>
    %c136 = arith.constant 136 : index
    %c0_24 = arith.constant 0 : index
    %63 = vector.load %arg1[%c136, %c0_24] : memref<400x128xf32, #tpu.memory_space<vmem>>, vector<128x128xf32>
    %c264 = arith.constant 264 : index
    %c0_25 = arith.constant 0 : index
    %64 = vector.load %arg1[%c264, %c0_25] : memref<400x128xf32, #tpu.memory_space<vmem>>, vector<128x4xf32>
    %65 = tpu.concatenate %2, %58 in 1 : vector<8x4xf32>, vector<8x4xf32> -> vector<8x8xf32>
    %cst_26 = arith.constant dense<0.000000e+00> : vector<8x128xf32>
    %66 = tpu.matmul %1, %61, %cst_26 {dimension_numbers = #tpu.dot_dimension_numbers<[1], [0], [0], [1], [0, 0, 1, 1], [], []>} : vector<8x32xf32>, vector<32x128xf32>, vector<8x128xf32> -> vector<8x128xf32>
    %cst_27 = arith.constant dense<0.000000e+00> : vector<8x128xf32>
    %67 = tpu.matmul %65, %62, %cst_27 {dimension_numbers = #tpu.dot_dimension_numbers<[1], [0], [0], [1], [0, 0, 1, 1], [], []>} : vector<8x8xf32>, vector<8x128xf32>, vector<8x128xf32> -> vector<8x128xf32>
    %68 = arith.addf %66, %67 : vector<8x128xf32>
    %69 = vector.extract_strided_slice %4 {offsets = [3, 0], sizes = [1, 128], strides = [1, 1]} : vector<6x128xf32> to vector<1x128xf32>
    %70 = vector.broadcast %69 : vector<1x128xf32> to vector<8x128xf32>
    %71 = arith.addf %68, %70 : vector<8x128xf32>
    %cst_28 = arith.constant 0.000000e+00 : f32
    %72 = vector.broadcast %cst_28 : f32 to vector<8x128xf32>
    %73 = arith.maximumf %71, %72 : vector<8x128xf32>
    %cst_29 = arith.constant dense<0.000000e+00> : vector<8x128xf32>
    %74 = tpu.matmul %73, %63, %cst_29 {dimension_numbers = #tpu.dot_dimension_numbers<[1], [0], [0], [1], [0, 0, 1, 1], [], []>} : vector<8x128xf32>, vector<128x128xf32>, vector<8x128xf32> -> vector<8x128xf32>
    %75 = vector.extract_strided_slice %4 {offsets = [4, 0], sizes = [1, 128], strides = [1, 1]} : vector<6x128xf32> to vector<1x128xf32>
    %76 = vector.broadcast %75 : vector<1x128xf32> to vector<8x128xf32>
    %77 = arith.addf %74, %76 : vector<8x128xf32>
    %cst_30 = arith.constant 0.000000e+00 : f32
    %78 = vector.broadcast %cst_30 : f32 to vector<8x128xf32>
    %79 = arith.maximumf %77, %78 : vector<8x128xf32>
    %cst_31 = arith.constant dense<0.000000e+00> : vector<8x4xf32>
    %80 = tpu.matmul %79, %64, %cst_31 {dimension_numbers = #tpu.dot_dimension_numbers<[1], [0], [0], [1], [0, 0, 1, 1], [], []>} : vector<8x128xf32>, vector<128x4xf32>, vector<8x4xf32> -> vector<8x4xf32>
    %81 = vector.extract_strided_slice %4 {offsets = [5, 0], sizes = [1, 4], strides = [1, 1]} : vector<6x128xf32> to vector<1x4xf32>
    %82 = vector.broadcast %81 : vector<1x4xf32> to vector<8x4xf32>
    %83 = arith.addf %80, %82 : vector<8x4xf32>
    %cst_32 = arith.constant 0.000000e+00 : f32
    %84 = vector.broadcast %cst_32 : f32 to vector<8x115xf32>
    %85 = tpu.concatenate %58, %60, %56, %83, %84 in 1 : vector<8x4xf32>, vector<8x4xf32>, vector<8x1xf32>, vector<8x4xf32>, vector<8x115xf32> -> vector<8x128xf32>
    %c0_33 = arith.constant 0 : index
    %c0_34 = arith.constant 0 : index
    %86 = vector.load %arg2[%c0_33, %c0_34] : memref<8x128xf32, #tpu.memory_space<vmem>>, vector<8x128xf32>
    tpu.vector_store %arg2[%c0_33, %c0_34], %85 {strides = array<i32>} : memref<8x128xf32, #tpu.memory_space<vmem>>, vector<8x128xf32>,
    return
  }
}

</mosaic_0001>

<llo_original>
// kernel: forward.1
$region0: #{forward.1}
  #allocation0 [shape = 'u32[]', space=smem, size = 0x4, offset = 0x4, fixed_abs, tag = 'smem constant byte address 0x4 - core index']
  #allocation1 [shape = 'u32[144,128]{1,0:T(1,128)}', space=vmem, size = 0x12000, scoped, tag = 'internal scratch']
  %s0 = inlined_call_operand.vmem [shape: f32[8,40], index: 0, kind: input, shape index: {}]
  %s1 = inlined_call_operand.hbm [shape: f32[400,128], index: 1, kind: input, shape index: {}]
  %s2 = inlined_call_operand.vmem [shape: f32[8,128], index: 2, kind: output, shape index: {}]
  %s3 = sld [smem:[#allocation0]]
  $region22: #{forward.1} parent=0
    _
  %s5 = ssub.s32 1, %s3
  %s6 = scalar_select 0, %s5, %s3
  $region1: #{forward.1} parent=0
    #allocation2 [shape = 'u8[204800]{0}', space=vmem, size = 0x32000, scoped, tag = 'input window, operand 1, single buffered']
    #allocation3 [shape = 's32[1]{0}', space=sflag, size = 0x4, scoped, tag = 'scoped memory for forward.1']
    %7 = vsyncpa [#allocation3], 0
    // Predicated region
    $region2: #{forward.1} parent=1 // pred_check
      _
    $region3: #{forward.1} parent=1 // pred_check_branch
      %9 = sbr.rel (0) target = $region5
    $region4: #{forward.1} parent=1 // pred_region
      _
    $region5: #{forward.1} parent=1 // pred_fallthru
      _
    // Predicated region
    $region6: #{forward.1} parent=1 // pred_check
      _
    $region7: #{forward.1} parent=1 // pred_check_branch
      %11 = sbr.rel (0) target = $region9
    $region8: #{forward.1} parent=1 // pred_region
      %s13 = ssub.s32 6400, 6400
      %14 = vsyncadd [#allocation3], %s13
      %s15 = sshll.u32 [#allocation2], 4
      %s16 = int_to_ptr.vmem [resolvable:$true] %s15
      %21 = dma.hbm_to_vmem [thread:$0]  %s1, 6400, %s16, [#allocation3], 128, 128, 8
    $region9: #{forward.1} parent=1 // pred_fallthru
      _
    // Predicated region
    $region10: #{forward.1} parent=1 // pred_check
      _
    $region11: #{forward.1} parent=1 // pred_check_branch
      %23 = sbr.rel (0) target = $region13
    $region12: #{forward.1} parent=1 // pred_region
      %24 = dma.done [#allocation3], 6400
    $region13: #{forward.1} parent=1 // pred_fallthru
      _
    %v25 = vld [vmem:[%s0] sm:$0xff]
    %v26 = vld [vmem:[#allocation2 + $0x188] sm:$0x3f]
    %v27 = vld [vmem:[#allocation2] sm:$0xff]
    %v28 = vld [vmem:[#allocation2 + $0x8] sm:$0xff]
    %v29 = vld [vmem:[#allocation2 + $0x10] sm:$0xff]
    %v30 = vld [vmem:[#allocation2 + $0x18] sm:$0xff]
    %v31 = vld [vmem:[#allocation2 + $0x20] sm:$0xff]
    %v32 = vld [vmem:[#allocation2 + $0x28] sm:$0xff]
    %v33 = vld [vmem:[#allocation2 + $0x30] sm:$0xff]
    %v34 = vld [vmem:[#allocation2 + $0x38] sm:$0xff]
    %v35 = vld [vmem:[#allocation2 + $0x40] sm:$0xff]
    %v36 = vld [vmem:[#allocation2 + $0x48] sm:$0xff]
    %v37 = vld [vmem:[#allocation2 + $0x50] sm:$0xff]
    %v38 = vld [vmem:[#allocation2 + $0x58] sm:$0xff]
    %v39 = vlaneseq
    %v40 = vshrl.u32 %v39, 7
    %v41 = vsub.s32 0, %v40
    %v42 = vrot.slane %v26, %v41
    %vm43 = vcmask 261120
    %v45 = vsel %vm43, %v25, 0
    %47 = vmatprep.subr.mxu0 0.0
    %48 = vmatpush1.msra.mxu0 %v27
    %49 = vmatprep.subr.mxu0 0.0
    %50 = vmatpush1.msra.mxu0 %v28
    %51 = vmatprep.subr.mxu0 0.0
    %52 = vmatpush1.msra.mxu0 %v29
    %53 = vmatprep.subr.mxu0 0.0
    %54 = vmatpush1.msra.mxu0 %v30
    %55 = vmatprep.subr.mxu0 0.0
    %56 = vmatpush1.msra.mxu0 0.0
    %57 = vmatprep.subr.mxu0 0.0
    %58 = vmatpush1.msra.mxu0 0.0
    %59 = vmatprep.subr.mxu0 0.0
    %60 = vmatpush1.msra.mxu0 0.0
    %61 = vmatprep.subr.mxu0 0.0
    %62 = vmatpush1.msra.mxu0 0.0
    %63 = vmatprep.subr.mxu0 0.0
    %64 = vmatpush1.msra.mxu0 0.0
    %65 = vmatprep.subr.mxu0 0.0
    %66 = vmatpush1.msra.mxu0 0.0
    %67 = vmatprep.subr.mxu0 0.0
    %68 = vmatpush1.msra.mxu0 0.0
    %69 = vmatprep.subr.mxu0 0.0
    %70 = vmatpush1.msra.mxu0 0.0
    %71 = vmatprep.subr.mxu0 0.0
    %72 = vmatpush1.msra.mxu0 0.0
    %73 = vmatprep.subr.mxu0 0.0
    %74 = vmatpush1.msra.mxu0 0.0
    %75 = vmatprep.subr.mxu0 0.0
    %76 = vmatpush1.msra.mxu0 0.0
    %77 = vmatprep.subr.mxu0 0.0
    %78 = vmatpush1.msra.mxu0 0.0
    %79 = vmatprep.subr.mxu0 0.0
    %80 = vmatpush1.msra.mxu0 0.0
    %81 = vmatprep.subr.mxu0 0.0
    %82 = vmatpush1.msra.mxu0 0.0
    %83 = vmatprep.subr.mxu0 0.0
    %84 = vmatpush1.msra.mxu0 0.0
    %85 = vmatprep.subr.mxu0 0.0
    %86 = vmatpush1.msra.mxu0 0.0
    %87 = vmatprep.subr.mxu0 0.0
    %88 = vmatpush1.msra.mxu0 0.0
    %89 = vmatprep.subr.mxu0 0.0
    %90 = vmatpush1.msra.mxu0 0.0
    %91 = vmatprep.subr.mxu0 0.0
    %92 = vmatpush1.msra.mxu0 0.0
    %93 = vmatprep.subr.mxu0 0.0
    %94 = vmatpush1.msra.mxu0 0.0
    %95 = vmatprep.subr.mxu0 0.0
    %96 = vmatpush1.msra.mxu0 0.0
    %97 = vmatprep.subr.mxu0 0.0
    %98 = vmatpush1.msra.mxu0 0.0
    %99 = vmatprep.subr.mxu0 0.0
    %100 = vmatpush1.msra.mxu0 0.0
    %101 = vmatprep.subr.mxu0 0.0
    %102 = vmatpush1.msra.mxu0 0.0
    %103 = vmatprep.subr.mxu0 0.0
    %104 = vmatpush1.msra.mxu0 0.0
    %105 = vmatprep.subr.mxu0 0.0
    %106 = vmatpush1.msra.mxu0 0.0
    %107 = vmatprep.subr.mxu0 0.0
    %108 = vmatpush1.msra.mxu0 0.0
    %109 = vmatprep.subr.mxu0 0.0
    %110 = vmatpush1.msra.mxu0 0.0
    %111 = vmatprep.mubr.f32.mxu0 0.0
    %112 = vmatmul.mubr.f32.gmra.mrb[0].mxu0 %v45
    %v113 = vpop.f32.mrb[0].mxu0
    %v114 = vadd.f32 %v42, %v113
    %v115 = vpop.f32.mrb[0].mxu0
    %116 = vdwg.mxu0
    %v117 = vmax.f32 %v114, 0.0
    %v118 = vlaneseq
    %v119 = vshrl.u32 %v118, 7
    %v120 = vsub.s32 1, %v119
    %v121 = vrot.slane %v26, %v120
    %v123 = vsel %vm43, %v117, 0
    %125 = vmatprep.subr.mxu0 0.0
    %126 = vmatpush1.msra.mxu0 %v31
    %127 = vmatprep.subr.mxu0 0.0
    %128 = vmatpush1.msra.mxu0 %v32
    %129 = vmatprep.subr.mxu0 0.0
    %130 = vmatpush1.msra.mxu0 %v33
    %131 = vmatprep.subr.mxu0 0.0
    %132 = vmatpush1.msra.mxu0 %v34
    %133 = vmatprep.subr.mxu0 0.0
    %134 = vmatpush1.msra.mxu0 0.0
    %135 = vmatprep.subr.mxu0 0.0
    %136 = vmatpush1.msra.mxu0 0.0
    %137 = vmatprep.subr.mxu0 0.0
    %138 = vmatpush1.msra.mxu0 0.0
    %139 = vmatprep.subr.mxu0 0.0
    %140 = vmatpush1.msra.mxu0 0.0
    %141 = vmatprep.subr.mxu0 0.0
    %142 = vmatpush1.msra.mxu0 0.0
    %143 = vmatprep.subr.mxu0 0.0
    %144 = vmatpush1.msra.mxu0 0.0
    %145 = vmatprep.subr.mxu0 0.0
    %146 = vmatpush1.msra.mxu0 0.0
    %147 = vmatprep.subr.mxu0 0.0
    %148 = vmatpush1.msra.mxu0 0.0
    %149 = vmatprep.subr.mxu0 0.0
    %150 = vmatpush1.msra.mxu0 0.0
    %151 = vmatprep.subr.mxu0 0.0
    %152 = vmatpush1.msra.mxu0 0.0
    %153 = vmatprep.subr.mxu0 0.0
    %154 = vmatpush1.msra.mxu0 0.0
    %155 = vmatprep.subr.mxu0 0.0
    %156 = vmatpush1.msra.mxu0 0.0
    %157 = vmatprep.subr.mxu0 0.0
    %158 = vmatpush1.msra.mxu0 0.0
    %159 = vmatprep.subr.mxu0 0.0
    %160 = vmatpush1.msra.mxu0 0.0
    %161 = vmatprep.subr.mxu0 0.0
    %162 = vmatpush1.msra.mxu0 0.0
    %163 = vmatprep.subr.mxu0 0.0
    %164 = vmatpush1.msra.mxu0 0.0
    %165 = vmatprep.subr.mxu0 0.0
    %166 = vmatpush1.msra.mxu0 0.0
    %167 = vmatprep.subr.mxu0 0.0
    %168 = vmatpush1.msra.mxu0 0.0
    %169 = vmatprep.subr.mxu0 0.0
    %170 = vmatpush1.msra.mxu0 0.0
    %171 = vmatprep.subr.mxu0 0.0
    %172 = vmatpush1.msra.mxu0 0.0
    %173 = vmatprep.subr.mxu0 0.0
    %174 = vmatpush1.msra.mxu0 0.0
    %175 = vmatprep.subr.mxu0 0.0
    %176 = vmatpush1.msra.mxu0 0.0
    %177 = vmatprep.subr.mxu0 0.0
    %178 = vmatpush1.msra.mxu0 0.0
    %179 = vmatprep.subr.mxu0 0.0
    %180 = vmatpush1.msra.mxu0 0.0
    %181 = vmatprep.subr.mxu0 0.0
    %182 = vmatpush1.msra.mxu0 0.0
    %183 = vmatprep.subr.mxu0 0.0
    %184 = vmatpush1.msra.mxu0 0.0
    %185 = vmatprep.subr.mxu0 0.0
    %186 = vmatpush1.msra.mxu0 0.0
    %187 = vmatprep.subr.mxu0 0.0
    %188 = vmatpush1.msra.mxu0 0.0
    %189 = vmatprep.mubr.f32.mxu0 0.0
    %190 = vmatmul.mubr.f32.gmra.mrb[0].mxu0 %v123
    %v191 = vpop.f32.mrb[0].mxu0
    %v192 = vadd.f32 %v121, %v191
    %v193 = vpop.f32.mrb[0].mxu0
    %194 = vdwg.mxu0
    %v195 = vmax.f32 %v192, 0.0
    %v196 = vlaneseq
    %v197 = vshrl.u32 %v196, 7
    %v198 = vsub.s32 2, %v197
    %v199 = vrot.slane %v26, %v198
    %v201 = vsel %vm43, %v195, 0
    %203 = vmatprep.subr.mxu0 0.0
    %204 = vmatpush1.msra.mxu0 %v35
    %205 = vmatprep.subr.mxu0 0.0
    %206 = vmatpush1.msra.mxu0 %v36
    %207 = vmatprep.subr.mxu0 0.0
    %208 = vmatpush1.msra.mxu0 %v37
    %209 = vmatprep.subr.mxu0 0.0
    %210 = vmatpush1.msra.mxu0 %v38
    %211 = vmatprep.subr.mxu0 0.0
    %212 = vmatpush1.msra.mxu0 0.0
    %213 = vmatprep.subr.mxu0 0.0
    %214 = vmatpush1.msra.mxu0 0.0
    %215 = vmatprep.subr.mxu0 0.0
    %216 = vmatpush1.msra.mxu0 0.0
    %217 = vmatprep.subr.mxu0 0.0
    %218 = vmatpush1.msra.mxu0 0.0
    %219 = vmatprep.subr.mxu0 0.0
    %220 = vmatpush1.msra.mxu0 0.0
    %221 = vmatprep.subr.mxu0 0.0
    %222 = vmatpush1.msra.mxu0 0.0
    %223 = vmatprep.subr.mxu0 0.0
    %224 = vmatpush1.msra.mxu0 0.0
    %225 = vmatprep.subr.mxu0 0.0
    %226 = vmatpush1.msra.mxu0 0.0
    %227 = vmatprep.subr.mxu0 0.0
    %228 = vmatpush1.msra.mxu0 0.0
    %229 = vmatprep.subr.mxu0 0.0
    %230 = vmatpush1.msra.mxu0 0.0
    %231 = vmatprep.subr.mxu0 0.0
    %232 = vmatpush1.msra.mxu0 0.0
    %233 = vmatprep.subr.mxu0 0.0
    %234 = vmatpush1.msra.mxu0 0.0
    %235 = vmatprep.subr.mxu0 0.0
    %236 = vmatpush1.msra.mxu0 0.0
    %237 = vmatprep.subr.mxu0 0.0
    %238 = vmatpush1.msra.mxu0 0.0
    %239 = vmatprep.subr.mxu0 0.0
    %240 = vmatpush1.msra.mxu0 0.0
    %241 = vmatprep.subr.mxu0 0.0
    %242 = vmatpush1.msra.mxu0 0.0
    %243 = vmatprep.subr.mxu0 0.0
    %244 = vmatpush1.msra.mxu0 0.0
    %245 = vmatprep.subr.mxu0 0.0
    %246 = vmatpush1.msra.mxu0 0.0
    %247 = vmatprep.subr.mxu0 0.0
    %248 = vmatpush1.msra.mxu0 0.0
    %249 = vmatprep.subr.mxu0 0.0
    %250 = vmatpush1.msra.mxu0 0.0
    %251 = vmatprep.subr.mxu0 0.0
    %252 = vmatpush1.msra.mxu0 0.0
    %253 = vmatprep.subr.mxu0 0.0
    %254 = vmatpush1.msra.mxu0 0.0
    %255 = vmatprep.subr.mxu0 0.0
    %256 = vmatpush1.msra.mxu0 0.0
    %257 = vmatprep.subr.mxu0 0.0
    %258 = vmatpush1.msra.mxu0 0.0
    %259 = vmatprep.subr.mxu0 0.0
    %260 = vmatpush1.msra.mxu0 0.0
    %261 = vmatprep.subr.mxu0 0.0
    %262 = vmatpush1.msra.mxu0 0.0
    %263 = vmatprep.subr.mxu0 0.0
    %264 = vmatpush1.msra.mxu0 0.0
    %265 = vmatprep.subr.mxu0 0.0
    %266 = vmatpush1.msra.mxu0 0.0
    %267 = vmatprep.mubr.f32.mxu0 0.0
    %268 = vmatmul.mubr.f32.gmra.mrb[0].mxu0 %v201
    %v269 = vpop.f32.mrb[0].mxu0
    %v270 = vadd.f32 %v199, %v269
    %v271 = vpop.f32.mrb[0].mxu0
    %272 = vdwg.mxu0
    %v273 = vtanh.pop %v270
    %v274 = vadd.f32 %v273, 1.0
    %v275 = vmul.f32 %v274, 11.0
    %v276 = vadd.f32 %v275, -20.0
    %v277 = vmul.f32 %v276, 1.442695
    %v278 = vpow.pop %v277
    %279 = vrot.lane.b32.xlu0 %v25, 96
    %v280 = vpop.permute.xlu0 %279
    %v282 = vmul.f32 %v278, %v280
    %284 = vrot.lane.b32.xlu0 %v282, 124
    %v285 = vpop.permute.xlu0 %284
    %v287 = vadd.f32 %v270, %v285
    %v288 = vtanh.pop %v287
    %v289 = vmul.f32 %v288, %v288
    %v290 = vsub.f32 1.0, %v289
    %v291 = vmax.f32 %v290, 0.0
    %v292 = vmin.f32 %v291, 1.0
    %v293 = vmul.f32 %v25, -0.5
    %v294 = vmul.f32 %v293, %v25
    %296 = vrot.lane.b32.xlu0 %v276, 32
    %v297 = vpop.permute.xlu0 %296
    %v299 = vsub.f32 %v294, %v297
    %v300 = vadd.f32 %v292, 1e-06
    %v301 = vlog2.pop %v300
    %v302 = vmul.f32 %v301, 0.6931472
    %304 = vrot.lane.b32.xlu0 %v302, 36
    %v305 = vpop.permute.xlu0 %304
    %v307 = vsub.f32 %v299, %v305
    %309 = vrot.lane.b32.xlu0 %v307, 92
    %v310 = vpop.permute.xlu0 %309
    %vm312 = vcmask 31744
    %v313 = vsel %vm312, %v310, 0.0
    %314 = vadd.xlane.f32.xlu0 %v313
    %v315 = vpop.xlane.xlu0 %314
    %v316 = vsub.f32 %v315, 3.675754
    %v317 = vld [vmem:[#allocation2 + $0x60] sm:$0xff]
    %v318 = vld [vmem:[#allocation2 + $0x68] sm:$0xff]
    %v319 = vld [vmem:[#allocation2 + $0x70] sm:$0xff]
    %v320 = vld [vmem:[#allocation2 + $0x78] sm:$0xff]
    %v321 = vld [vmem:[#allocation2 + $0x80] sm:$0xff]
    %v322 = vld [vmem:[#allocation2 + $0x88] sm:$0xff]
    %v323 = vld [vmem:[#allocation2 + $0x90] sm:$0xff]
    %v324 = vld [vmem:[#allocation2 + $0x98] sm:$0xff]
    %v325 = vld [vmem:[#allocation2 + $0xa0] sm:$0xff]
    %v326 = vld [vmem:[#allocation2 + $0xa8] sm:$0xff]
    %v327 = vld [vmem:[#allocation2 + $0xb0] sm:$0xff]
    %v328 = vld [vmem:[#allocation2 + $0xb8] sm:$0xff]
    %v329 = vld [vmem:[#allocation2 + $0xc0] sm:$0xff]
    %v330 = vld [vmem:[#allocation2 + $0xc8] sm:$0xff]
    %v331 = vld [vmem:[#allocation2 + $0xd0] sm:$0xff]
    %v332 = vld [vmem:[#allocation2 + $0xd8] sm:$0xff]
    %v333 = vld [vmem:[#allocation2 + $0xe0] sm:$0xff]
    %v334 = vld [vmem:[#allocation2 + $0xe8] sm:$0xff]
    %v335 = vld [vmem:[#allocation2 + $0xf0] sm:$0xff]
    %v336 = vld [vmem:[#allocation2 + $0xf8] sm:$0xff]
    %v337 = vld [vmem:[#allocation2 + $0x100] sm:$0xff]
    %v338 = vld [vmem:[#allocation2 + $0x108] sm:$0xff]
    %v339 = vld [vmem:[#allocation2 + $0x110] sm:$0xff]
    %v340 = vld [vmem:[#allocation2 + $0x118] sm:$0xff]
    %v341 = vld [vmem:[#allocation2 + $0x120] sm:$0xff]
    %v342 = vld [vmem:[#allocation2 + $0x128] sm:$0xff]
    %v343 = vld [vmem:[#allocation2 + $0x130] sm:$0xff]
    %v344 = vld [vmem:[#allocation2 + $0x138] sm:$0xff]
    %v345 = vld [vmem:[#allocation2 + $0x140] sm:$0xff]
    %v346 = vld [vmem:[#allocation2 + $0x148] sm:$0xff]
    %v347 = vld [vmem:[#allocation2 + $0x150] sm:$0xff]
    %v348 = vld [vmem:[#allocation2 + $0x158] sm:$0xff]
    %v349 = vld [vmem:[#allocation2 + $0x160] sm:$0xff]
    %v350 = vld [vmem:[#allocation2 + $0x168] sm:$0xff]
    %v351 = vld [vmem:[#allocation2 + $0x170] sm:$0xff]
    %v352 = vld [vmem:[#allocation2 + $0x178] sm:$0xff]
    %v353 = vld [vmem:[#allocation2 + $0x180] sm:$0xff]
    %355 = vrot.lane.b32.xlu0 %v288, 4
    %v356 = vpop.permute.xlu0 %355
    %v358 = vsel %vm312, %v280, %v356
    %vm359 = vcmask 64512
    %v361 = vsel %vm359, %v358, 0
    %363 = vmatprep.subr.mxu0 0.0
    %364 = vmatpush1.msra.mxu0 %v321
    %365 = vmatprep.subr.mxu0 0.0
    %366 = vmatpush1.msra.mxu0 0.0
    %367 = vmatprep.subr.mxu0 0.0
    %368 = vmatpush1.msra.mxu0 0.0
    %369 = vmatprep.subr.mxu0 0.0
    %370 = vmatpush1.msra.mxu0 0.0
    %371 = vmatprep.subr.mxu0 0.0
    %372 = vmatpush1.msra.mxu0 0.0
    %373 = vmatprep.subr.mxu0 0.0
    %374 = vmatpush1.msra.mxu0 0.0
    %375 = vmatprep.subr.mxu0 0.0
    %376 = vmatpush1.msra.mxu0 0.0
    %377 = vmatprep.subr.mxu0 0.0
    %378 = vmatpush1.msra.mxu0 0.0
    %379 = vmatprep.subr.mxu0 0.0
    %380 = vmatpush1.msra.mxu0 0.0
    %381 = vmatprep.subr.mxu0 0.0
    %382 = vmatpush1.msra.mxu0 0.0
    %383 = vmatprep.subr.mxu0 0.0
    %384 = vmatpush1.msra.mxu0 0.0
    %385 = vmatprep.subr.mxu0 0.0
    %386 = vmatpush1.msra.mxu0 0.0
    %387 = vmatprep.subr.mxu0 0.0
    %388 = vmatpush1.msra.mxu0 0.0
    %389 = vmatprep.subr.mxu0 0.0
    %390 = vmatpush1.msra.mxu0 0.0
    %391 = vmatprep.subr.mxu0 0.0
    %392 = vmatpush1.msra.mxu0 0.0
    %393 = vmatprep.subr.mxu0 0.0
    %394 = vmatpush1.msra.mxu0 0.0
    %395 = vmatprep.subr.mxu0 0.0
    %396 = vmatpush1.msra.mxu0 0.0
    %397 = vmatprep.subr.mxu0 0.0
    %398 = vmatpush1.msra.mxu0 0.0
    %399 = vmatprep.subr.mxu0 0.0
    %400 = vmatpush1.msra.mxu0 0.0
    %401 = vmatprep.subr.mxu0 0.0
    %402 = vmatpush1.msra.mxu0 0.0
    %403 = vmatprep.subr.mxu0 0.0
    %404 = vmatpush1.msra.mxu0 0.0
    %405 = vmatprep.subr.mxu0 0.0
    %406 = vmatpush1.msra.mxu0 0.0
    %407 = vmatprep.subr.mxu0 0.0
    %408 = vmatpush1.msra.mxu0 0.0
    %409 = vmatprep.subr.mxu0 0.0
    %410 = vmatpush1.msra.mxu0 0.0
    %411 = vmatprep.subr.mxu0 0.0
    %412 = vmatpush1.msra.mxu0 0.0
    %413 = vmatprep.subr.mxu0 0.0
    %414 = vmatpush1.msra.mxu0 0.0
    %415 = vmatprep.subr.mxu0 0.0
    %416 = vmatpush1.msra.mxu0 0.0
    %417 = vmatprep.subr.mxu0 0.0
    %418 = vmatpush1.msra.mxu0 0.0
    %419 = vmatprep.subr.mxu0 0.0
    %420 = vmatpush1.msra.mxu0 0.0
    %421 = vmatprep.subr.mxu0 0.0
    %422 = vmatpush1.msra.mxu0 0.0
    %423 = vmatprep.subr.mxu0 0.0
    %424 = vmatpush1.msra.mxu0 0.0
    %425 = vmatprep.subr.mxu0 0.0
    %426 = vmatpush1.msra.mxu0 0.0
    %427 = vmatprep.mubr.f32.mxu0 0.0
    %428 = vmatmul.mubr.f32.gmra.mrb[0].mxu0 %v361
    %v429 = vpop.f32.mrb[0].mxu0
    %v430 = vadd.f32 0.0, %v429
    %v431 = vpop.f32.mrb[0].mxu0
    %432 = vdwg.mxu0
    %433 = vmatprep.subr.mxu0 0.0
    %434 = vmatpush1.msra.mxu0 %v317
    %435 = vmatprep.subr.mxu0 0.0
    %436 = vmatpush1.msra.mxu0 %v318
    %437 = vmatprep.subr.mxu0 0.0
    %438 = vmatpush1.msra.mxu0 %v319
    %439 = vmatprep.subr.mxu0 0.0
    %440 = vmatpush1.msra.mxu0 %v320
    %441 = vmatprep.subr.mxu0 0.0
    %442 = vmatpush1.msra.mxu0 0.0
    %443 = vmatprep.subr.mxu0 0.0
    %444 = vmatpush1.msra.mxu0 0.0
    %445 = vmatprep.subr.mxu0 0.0
    %446 = vmatpush1.msra.mxu0 0.0
    %447 = vmatprep.subr.mxu0 0.0
    %448 = vmatpush1.msra.mxu0 0.0
    %449 = vmatprep.subr.mxu0 0.0
    %450 = vmatpush1.msra.mxu0 0.0
    %451 = vmatprep.subr.mxu0 0.0
    %452 = vmatpush1.msra.mxu0 0.0
    %453 = vmatprep.subr.mxu0 0.0
    %454 = vmatpush1.msra.mxu0 0.0
    %455 = vmatprep.subr.mxu0 0.0
    %456 = vmatpush1.msra.mxu0 0.0
    %457 = vmatprep.subr.mxu0 0.0
    %458 = vmatpush1.msra.mxu0 0.0
    %459 = vmatprep.subr.mxu0 0.0
    %460 = vmatpush1.msra.mxu0 0.0
    %461 = vmatprep.subr.mxu0 0.0
    %462 = vmatpush1.msra.mxu0 0.0
    %463 = vmatprep.subr.mxu0 0.0
    %464 = vmatpush1.msra.mxu0 0.0
    %465 = vmatprep.subr.mxu0 0.0
    %466 = vmatpush1.msra.mxu0 0.0
    %467 = vmatprep.subr.mxu0 0.0
    %468 = vmatpush1.msra.mxu0 0.0
    %469 = vmatprep.subr.mxu0 0.0
    %470 = vmatpush1.msra.mxu0 0.0
    %471 = vmatprep.subr.mxu0 0.0
    %472 = vmatpush1.msra.mxu0 0.0
    %473 = vmatprep.subr.mxu0 0.0
    %474 = vmatpush1.msra.mxu0 0.0
    %475 = vmatprep.subr.mxu0 0.0
    %476 = vmatpush1.msra.mxu0 0.0
    %477 = vmatprep.subr.mxu0 0.0
    %478 = vmatpush1.msra.mxu0 0.0
    %479 = vmatprep.subr.mxu0 0.0
    %480 = vmatpush1.msra.mxu0 0.0
    %481 = vmatprep.subr.mxu0 0.0
    %482 = vmatpush1.msra.mxu0 0.0
    %483 = vmatprep.subr.mxu0 0.0
    %484 = vmatpush1.msra.mxu0 0.0
    %485 = vmatprep.subr.mxu0 0.0
    %486 = vmatpush1.msra.mxu0 0.0
    %487 = vmatprep.subr.mxu0 0.0
    %488 = vmatpush1.msra.mxu0 0.0
    %489 = vmatprep.subr.mxu0 0.0
    %490 = vmatpush1.msra.mxu0 0.0
    %491 = vmatprep.subr.mxu0 0.0
    %492 = vmatpush1.msra.mxu0 0.0
    %493 = vmatprep.subr.mxu0 0.0
    %494 = vmatpush1.msra.mxu0 0.0
    %495 = vmatprep.subr.mxu0 0.0
    %496 = vmatpush1.msra.mxu0 0.0
    %497 = vmatprep.mubr.f32.mxu0 0.0
    %498 = vmatmul.mubr.f32.gmra.mrb[0].mxu0 %v45
    %v499 = vpop.f32.mrb[0].mxu0
    %v500 = vadd.f32 %v430, %v499
    %v501 = vpop.f32.mrb[0].mxu0
    %502 = vdwg.mxu0
    %v503 = vlaneseq
    %v504 = vshrl.u32 %v503, 7
    %v505 = vsub.s32 3, %v504
    %v506 = vrot.slane %v26, %v505
    %v507 = vadd.f32 %v500, %v506
    %v508 = vmax.f32 %v507, 0.0
    %v509 = vlaneseq
    %v510 = vshrl.u32 %v509, 7
    %v511 = vsub.s32 4, %v510
    %v512 = vrot.slane %v26, %v511
    %513 = vmatprep.subr.mxu0 0.0
    %514 = vmatpush1.msra.mxu0 %v322
    %515 = vmatprep.subr.mxu0 0.0
    %516 = vmatpush1.msra.mxu0 %v323
    %517 = vmatprep.subr.mxu0 0.0
    %518 = vmatpush1.msra.mxu0 %v324
    %519 = vmatprep.subr.mxu0 0.0
    %520 = vmatpush1.msra.mxu0 %v325
    %521 = vmatprep.subr.mxu0 0.0
    %522 = vmatpush1.msra.mxu0 %v326
    %523 = vmatprep.subr.mxu0 0.0
    %524 = vmatpush1.msra.mxu0 %v327
    %525 = vmatprep.subr.mxu0 0.0
    %526 = vmatpush1.msra.mxu0 %v328
    %527 = vmatprep.subr.mxu0 0.0
    %528 = vmatpush1.msra.mxu0 %v329
    %529 = vmatprep.subr.mxu0 0.0
    %530 = vmatpush1.msra.mxu0 %v330
    %531 = vmatprep.subr.mxu0 0.0
    %532 = vmatpush1.msra.mxu0 %v331
    %533 = vmatprep.subr.mxu0 0.0
    %534 = vmatpush1.msra.mxu0 %v332
    %535 = vmatprep.subr.mxu0 0.0
    %536 = vmatpush1.msra.mxu0 %v333
    %537 = vmatprep.subr.mxu0 0.0
    %538 = vmatpush1.msra.mxu0 %v334
    %539 = vmatprep.subr.mxu0 0.0
    %540 = vmatpush1.msra.mxu0 %v335
    %541 = vmatprep.subr.mxu0 0.0
    %542 = vmatpush1.msra.mxu0 %v336
    %543 = vmatprep.subr.mxu0 0.0
    %544 = vmatpush1.msra.mxu0 %v337
    %545 = vmatprep.subr.mxu0 0.0
    %546 = vmatpush1.msra.mxu0 0.0
    %547 = vmatprep.subr.mxu0 0.0
    %548 = vmatpush1.msra.mxu0 0.0
    %549 = vmatprep.subr.mxu0 0.0
    %550 = vmatpush1.msra.mxu0 0.0
    %551 = vmatprep.subr.mxu0 0.0
    %552 = vmatpush1.msra.mxu0 0.0
    %553 = vmatprep.subr.mxu0 0.0
    %554 = vmatpush1.msra.mxu0 0.0
    %555 = vmatprep.subr.mxu0 0.0
    %556 = vmatpush1.msra.mxu0 0.0
    %557 = vmatprep.subr.mxu0 0.0
    %558 = vmatpush1.msra.mxu0 0.0
    %559 = vmatprep.subr.mxu0 0.0
    %560 = vmatpush1.msra.mxu0 0.0
    %561 = vmatprep.subr.mxu0 0.0
    %562 = vmatpush1.msra.mxu0 0.0
    %563 = vmatprep.subr.mxu0 0.0
    %564 = vmatpush1.msra.mxu0 0.0
    %565 = vmatprep.subr.mxu0 0.0
    %566 = vmatpush1.msra.mxu0 0.0
    %567 = vmatprep.subr.mxu0 0.0
    %568 = vmatpush1.msra.mxu0 0.0
    %569 = vmatprep.subr.mxu0 0.0
    %570 = vmatpush1.msra.mxu0 0.0
    %571 = vmatprep.subr.mxu0 0.0
    %572 = vmatpush1.msra.mxu0 0.0
    %573 = vmatprep.subr.mxu0 0.0
    %574 = vmatpush1.msra.mxu0 0.0
    %575 = vmatprep.subr.mxu0 0.0
    %576 = vmatpush1.msra.mxu0 0.0
    %577 = vmatprep.mubr.f32.mxu0 0.0
    %578 = vmatmul.mubr.f32.gmra.mrb[0].mxu0 %v508
    %v579 = vpop.f32.mrb[0].mxu0
    %v580 = vadd.f32 %v512, %v579
    %v581 = vpop.f32.mrb[0].mxu0
    %582 = vdwg.mxu0
    %v583 = vmax.f32 %v580, 0.0
    %v584 = vlaneseq
    %v585 = vshrl.u32 %v584, 7
    %v586 = vsub.s32 5, %v585
    %v587 = vrot.slane %v26, %v586
    %588 = vmatprep.subr.mxu0 0.0
    %589 = vmatpush1.msra.mxu0 %v338
    %590 = vmatprep.subr.mxu0 0.0
    %591 = vmatpush1.msra.mxu0 %v339
    %592 = vmatprep.subr.mxu0 0.0
    %593 = vmatpush1.msra.mxu0 %v340
    %594 = vmatprep.subr.mxu0 0.0
    %595 = vmatpush1.msra.mxu0 %v341
    %596 = vmatprep.subr.mxu0 0.0
    %597 = vmatpush1.msra.mxu0 %v342
    %598 = vmatprep.subr.mxu0 0.0
    %599 = vmatpush1.msra.mxu0 %v343
    %600 = vmatprep.subr.mxu0 0.0
    %601 = vmatpush1.msra.mxu0 %v344
    %602 = vmatprep.subr.mxu0 0.0
    %603 = vmatpush1.msra.mxu0 %v345
    %604 = vmatprep.subr.mxu0 0.0
    %605 = vmatpush1.msra.mxu0 %v346
    %606 = vmatprep.subr.mxu0 0.0
    %607 = vmatpush1.msra.mxu0 %v347
    %608 = vmatprep.subr.mxu0 0.0
    %609 = vmatpush1.msra.mxu0 %v348
    %610 = vmatprep.subr.mxu0 0.0
    %611 = vmatpush1.msra.mxu0 %v349
    %612 = vmatprep.subr.mxu0 0.0
    %613 = vmatpush1.msra.mxu0 %v350
    %614 = vmatprep.subr.mxu0 0.0
    %615 = vmatpush1.msra.mxu0 %v351
    %616 = vmatprep.subr.mxu0 0.0
    %617 = vmatpush1.msra.mxu0 %v352
    %618 = vmatprep.subr.mxu0 0.0
    %619 = vmatpush1.msra.mxu0 %v353
    %620 = vmatprep.subr.mxu0 0.0
    %621 = vmatpush1.msra.mxu0 0.0
    %622 = vmatprep.subr.mxu0 0.0
    %623 = vmatpush1.msra.mxu0 0.0
    %624 = vmatprep.subr.mxu0 0.0
    %625 = vmatpush1.msra.mxu0 0.0
    %626 = vmatprep.subr.mxu0 0.0
    %627 = vmatpush1.msra.mxu0 0.0
    %628 = vmatprep.subr.mxu0 0.0
    %629 = vmatpush1.msra.mxu0 0.0
    %630 = vmatprep.subr.mxu0 0.0
    %631 = vmatpush1.msra.mxu0 0.0
    %632 = vmatprep.subr.mxu0 0.0
    %633 = vmatpush1.msra.mxu0 0.0
    %634 = vmatprep.subr.mxu0 0.0
    %635 = vmatpush1.msra.mxu0 0.0
    %636 = vmatprep.subr.mxu0 0.0
    %637 = vmatpush1.msra.mxu0 0.0
    %638 = vmatprep.subr.mxu0 0.0
    %639 = vmatpush1.msra.mxu0 0.0
    %640 = vmatprep.subr.mxu0 0.0
    %641 = vmatpush1.msra.mxu0 0.0
    %642 = vmatprep.subr.mxu0 0.0
    %643 = vmatpush1.msra.mxu0 0.0
    %644 = vmatprep.subr.mxu0 0.0
    %645 = vmatpush1.msra.mxu0 0.0
    %646 = vmatprep.subr.mxu0 0.0
    %647 = vmatpush1.msra.mxu0 0.0
    %648 = vmatprep.subr.mxu0 0.0
    %649 = vmatpush1.msra.mxu0 0.0
    %650 = vmatprep.subr.mxu0 0.0
    %651 = vmatpush1.msra.mxu0 0.0
    %652 = vmatprep.mubr.f32.mxu0 0.0
    %653 = vmatmul.mubr.f32.gmra.mrb[0].mxu0 %v583
    %v654 = vpop.f32.mrb[0].mxu0
    %v655 = vadd.f32 %v587, %v654
    %v656 = vpop.f32.mrb[0].mxu0
    %657 = vdwg.mxu0
    %659 = vrot.lane.b32.xlu0 %v273, 4
    %v660 = vpop.permute.xlu0 %659
    %663 = vrot.lane.b32.xlu0 %v655, 9
    %v664 = vpop.permute.xlu0 %663
    %v666 = vsel %vm312, %v288, %v660
    %v667 = vsel %vm359, %v666, %v316
    %vm668 = vcmask 72704
    %v669 = vsel %vm668, %v667, %v664
    %vm670 = vcmask 105472
    %v671 = vsel %vm670, %v669, 0.0
    %672 = vst [vmem:[%s2] sm:$0xff] %v671
    // Predicated region
    $region14: #{forward.1} parent=1 // pred_check
      _
    $region15: #{forward.1} parent=1 // pred_check_branch
      %674 = sbr.rel (0) target = $region17
    $region16: #{forward.1} parent=1 // pred_region
      _
    $region17: #{forward.1} parent=1 // pred_fallthru
      _
    // Predicated region
    $region18: #{forward.1} parent=1 // pred_check
      _
    $region19: #{forward.1} parent=1 // pred_check_branch
      %676 = sbr.rel (0) target = $region21
    $region20: #{forward.1} parent=1 // pred_region
      _
    $region21: #{forward.1} parent=1 // pred_fallthru
      _
    %677 = vsyncpa [#allocation3], 1

</llo_original>
